<compile_context>
chip_gen: v7x
topology: tpu7x:2x2x1
jax: 0.10.0
libtpu: 0.0.40
codegen_flags: <defaults>
</compile_context>

<pallas_src>
import math

import jax
import jax.numpy as jnp
from jax import lax
from jax.experimental import pallas as pl
from jax.experimental.pallas import tpu as pltpu


def _round_up(x, m):
    return (x + m - 1) // m * m


def _ffn_kernel(x_ref, w1_ref, b1_ref, w2_ref, b2_ref, o_ref, acc_ref):
    # x_ref : (tm, d_model_p)   compute dtype (bf16 default)
    # w1_ref: (d_model_p, tf)   compute dtype
    # b1_ref: (1, tf)           f32
    # w2_ref: (tf, d_model_p)   compute dtype
    # b2_ref: (1, d_model_p)    f32
    # o_ref : (tm, d_model_p)   output dtype
    # acc_ref: (tm, d_model_p)  f32 accumulator, resident across the d_ff grid axis
    f = pl.program_id(1)

    @pl.when(f == 0)
    def _init():
        acc_ref[...] = jnp.zeros_like(acc_ref)

    # fc1 chunk on the MXU (f32 accumulation), bias add in f32.
    h = jnp.dot(x_ref[...], w1_ref[...], preferred_element_type=jnp.float32)
    h = h + b1_ref[...]

    # Exact erf-based GELU (matches the torch module's formulation), in f32.
    g = h * 0.5 * (1.0 + lax.erf(h * (1.0 / math.sqrt(2.0))))

    # fc2 chunk, accumulated over the streamed d_ff axis.
    acc_ref[...] += jnp.dot(
        g.astype(w2_ref.dtype), w2_ref[...], preferred_element_type=jnp.float32
    )

    @pl.when(f == pl.num_programs(1) - 1)
    def _finalize():
        o_ref[...] = (acc_ref[...] + b2_ref[...]).astype(o_ref.dtype)


def poswise_ffn(x, w1, b1, w2, b2, *, tm=256, tf=512, compute_dtype=jnp.bfloat16):
    """x: [B, S, d_model]; w1: [d_model, d_ff]; b1: [d_ff]; w2: [d_ff, d_model]; b2: [d_model]."""
    B, S, d_model = x.shape
    d_ff = w1.shape[1]
    N = B * S
    out_dtype = x.dtype

    # ---- tile sizes -------------------------------------------------------
    tm = min(tm, _round_up(N, 8))          # big token tile, but no gross over-padding
    tm = _round_up(tm, 8)
    if d_ff <= tf:                         # small d_ff: single f step, full-extent block
        tf = d_ff
        d_ff_p = d_ff
    else:                                  # large d_ff: 128-aligned streamed tiles
        tf = _round_up(tf, 128)
        d_ff_p = _round_up(d_ff, tf)

    d_model_p = _round_up(d_model, 128)    # lane-dense stores / MXU-friendly feature dim
    N_p = _round_up(N, tm)                 # no ragged token tile

    # ---- pad + cast once in the wrapper (not per grid step) ---------------
    x2d = x.reshape(N, d_model)
    x2d = jnp.pad(x2d, ((0, N_p - N), (0, d_model_p - d_model))).astype(compute_dtype)
    w1_p = jnp.pad(w1, ((0, d_model_p - d_model), (0, d_ff_p - d_ff))).astype(compute_dtype)
    w2_p = jnp.pad(w2, ((0, d_ff_p - d_ff), (0, d_model_p - d_model))).astype(compute_dtype)
    b1_p = jnp.pad(b1, (0, d_ff_p - d_ff)).astype(jnp.float32).reshape(1, d_ff_p)
    b2_p = jnp.pad(b2, (0, d_model_p - d_model)).astype(jnp.float32).reshape(1, d_model_p)

    grid = (N_p // tm, d_ff_p // tf)

    # ---- explicit VMEM budget (double-buffered streamed tiles + scratch) --
    csz = jnp.dtype(compute_dtype).itemsize
    osz = jnp.dtype(out_dtype).itemsize
    est = (
        2 * (tm * d_model_p * csz            # x tile
             + d_model_p * tf * csz          # W1 tile
             + tf * d_model_p * csz          # W2 tile
             + tf * 4 + d_model_p * 4        # biases
             + tm * d_model_p * osz)         # out tile
        + tm * d_model_p * 4                 # f32 accumulator scratch
        + tm * tf * 4                        # h / g intermediate
    )
    vmem_limit = int(min(96 * 2**20, max(32 * 2**20, 2 * est)))

    cost = pl.CostEstimate(
        flops=4 * N * d_model * d_ff,
        transcendentals=N * d_ff,
        bytes_accessed=(
            x.size * x.dtype.itemsize
            + w1.size * w1.dtype.itemsize
            + w2.size * w2.dtype.itemsize
            + b1.size * b1.dtype.itemsize
            + b2.size * b2.dtype.itemsize
            + N * d_model * osz
        ),
    )

    out2d = pl.pallas_call(
        _ffn_kernel,
        out_shape=jax.ShapeDtypeStruct((N_p, d_model_p), out_dtype),
        grid_spec=pltpu.PrefetchScalarGridSpec(
            num_scalar_prefetch=0,
            grid=grid,
            in_specs=[
                pl.BlockSpec((tm, d_model_p), lambda i, f: (i, 0)),   # x tile (resident over f)
                pl.BlockSpec((d_model_p, tf), lambda i, f: (0, f)),   # W1 streamed over d_ff
                pl.BlockSpec((1, tf),         lambda i, f: (0, f)),   # b1 chunk
                pl.BlockSpec((tf, d_model_p), lambda i, f: (f, 0)),   # W2 streamed over d_ff
                pl.BlockSpec((1, d_model_p),  lambda i, f: (0, 0)),   # b2 (constant)
            ],
            out_specs=pl.BlockSpec((tm, d_model_p), lambda i, f: (i, 0)),
            scratch_shapes=[pltpu.VMEM((tm, d_model_p), jnp.float32)],
        ),
        compiler_params=pltpu.CompilerParams(
            dimension_semantics=("parallel", "arbitrary"),
            vmem_limit_bytes=vmem_limit,
        ),
        cost_estimate=cost,
    )(x2d, w1_p, b1_p, w2_p, b2_p)

    return out2d[:N, :d_model].reshape(B, S, d_model)


def poswise_ffn_ref(x, w1, b1, w2, b2):
    h = jnp.einsum("bsd,df->bsf", x, w1) + b1
    g = h * 0.5 * (1.0 + lax.erf(h / math.sqrt(2.0)))
    return jnp.einsum("bsf,fd->bsd", g, w2) + b2


if __name__ == "__main__":
    # Small shapes consistent with the module's forward.
    B, S, d_model, d_ff = 2, 8, 32, 64

    key = jax.random.PRNGKey(0)
    kx, kw1, kb1, kw2, kb2 = jax.random.split(key, 5)

    x = jax.random.normal(kx, (B, S, d_model), dtype=jnp.float32)

    # Deterministic synthetic parameter init (nn.Linear-like uniform bounds).
    bound1 = 1.0 / math.sqrt(d_model)
    bound2 = 1.0 / math.sqrt(d_ff)
    w1 = jax.random.uniform(kw1, (d_model, d_ff), minval=-bound1, maxval=bound1, dtype=jnp.float32)
    b1 = jax.random.uniform(kb1, (d_ff,), minval=-bound1, maxval=bound1, dtype=jnp.float32)
    w2 = jax.random.uniform(kw2, (d_ff, d_model), minval=-bound2, maxval=bound2, dtype=jnp.float32)
    b2 = jax.random.uniform(kb2, (d_model,), minval=-bound2, maxval=bound2, dtype=jnp.float32)

    ref = poswise_ffn_ref(x, w1, b1, w2, b2)

    # Exact-precision path (f32 MXU operands): tight tolerance vs the f32 reference.
    out_f32 = jax.block_until_ready(poswise_ffn(x, w1, b1, w2, b2, compute_dtype=jnp.float32))
    assert out_f32.shape == (B, S, d_model)
    assert jnp.allclose(out_f32, ref, atol=1e-5, rtol=1e-5)

    # Default fast path (bf16 MXU operands, f32 accumulation): looser tolerance.
    out_bf16 = jax.block_until_ready(poswise_ffn(x, w1, b1, w2, b2))
    assert out_bf16.shape == (B, S, d_model)
    assert jnp.allclose(out_bf16, ref, atol=5e-2, rtol=5e-2)

    # Second shape with ragged token count and non-128-aligned dims to exercise padding.
    B2, S2, dm2, dff2 = 2, 5, 48, 160
    k2 = jax.random.PRNGKey(1)
    ka, kb_, kc, kd, ke = jax.random.split(k2, 5)
    x2 = jax.random.normal(ka, (B2, S2, dm2), dtype=jnp.float32)
    w1b = jax.random.uniform(kb_, (dm2, dff2), minval=-0.1, maxval=0.1, dtype=jnp.float32)
    b1b = jax.random.uniform(kc, (dff2,), minval=-0.1, maxval=0.1, dtype=jnp.float32)
    w2b = jax.random.uniform(kd, (dff2, dm2), minval=-0.1, maxval=0.1, dtype=jnp.float32)
    b2b = jax.random.uniform(ke, (dm2,), minval=-0.1, maxval=0.1, dtype=jnp.float32)
    out2 = jax.block_until_ready(poswise_ffn(x2, w1b, b1b, w2b, b2b))
    ref2 = poswise_ffn_ref(x2, w1b, b1b, w2b, b2b)
    assert out2.shape == (B2, S2, dm2)
    assert jnp.allclose(out2, ref2, atol=5e-2, rtol=5e-2)

    print("KERNEL_OK")
</pallas_src>

<mosaic_0001>
module attributes {stable_mosaic.version = 11 : i64} {
  func.func @_ffn_kernel(%arg0: i32, %arg1: i32, %arg2: memref<16x128xf32, #tpu.memory_space<vmem>>, %arg3: memref<128x64xf32, #tpu.memory_space<vmem>>, %arg4: memref<1x64xf32, #tpu.memory_space<vmem>>, %arg5: memref<64x128xf32, #tpu.memory_space<vmem>>, %arg6: memref<1x128xf32, #tpu.memory_space<vmem>>, %arg7: memref<16x128xf32, #tpu.memory_space<vmem>>, %arg8: memref<16x128xf32, #tpu.memory_space<vmem>>) attributes {dimension_semantics = [#tpu.dimension_semantics<parallel>, #tpu.dimension_semantics<arbitrary>], iteration_bounds = array<i64: 1, 1>, scalar_prefetch = 0 : i64, scratch_operands = 1 : i64, tpu.core_type = #tpu.core_type<tc>, window_params = [{transform_indices = @transform_0, window_bounds = array<i64: 16, 128>}, {transform_indices = @transform_1, window_bounds = array<i64: 128, 64>}, {transform_indices = @transform_2, window_bounds = array<i64: 1, 64>}, {transform_indices = @transform_3, window_bounds = array<i64: 64, 128>}, {pipeline_mode = #tpu.pipeline_mode<synchronous>, transform_indices = @transform_4, window_bounds = array<i64: 1, 128>}, {transform_indices = @transform_5, window_bounds = array<i64: 16, 128>}]} {
    %c0_i32 = arith.constant 0 : i32
    %0 = arith.cmpi eq, %arg1, %c0_i32 : i32
    %1 = arith.extui %0 : i1 to i32
    %c0_i32_0 = arith.constant 0 : i32
    %2 = arith.cmpi ne, %1, %c0_i32_0 : i32
    scf.if %2 {
      %cst_18 = arith.constant 0.000000e+00 : f32
      %25 = vector.broadcast %cst_18 : f32 to vector<16x128xf32>
      %c0_19 = arith.constant 0 : index
      %c0_20 = arith.constant 0 : index
      %26 = vector.load %arg8[%c0_19, %c0_20] : memref<16x128xf32, #tpu.memory_space<vmem>>, vector<16x128xf32>
      tpu.vector_store %arg8[%c0_19, %c0_20], %25 {strides = array<i32>} : memref<16x128xf32, #tpu.memory_space<vmem>>, vector<16x128xf32>,
    } else {
    }
    %c0 = arith.constant 0 : index
    %c0_1 = arith.constant 0 : index
    %3 = vector.load %arg2[%c0, %c0_1] : memref<16x128xf32, #tpu.memory_space<vmem>>, vector<16x128xf32>
    %c0_2 = arith.constant 0 : index
    %c0_3 = arith.constant 0 : index
    %4 = vector.load %arg3[%c0_2, %c0_3] : memref<128x64xf32, #tpu.memory_space<vmem>>, vector<128x64xf32>
    %cst = arith.constant dense<0.000000e+00> : vector<16x64xf32>
    %5 = tpu.matmul %3, %4, %cst {dimension_numbers = #tpu.dot_dimension_numbers<[1], [0], [0], [1], [0, 0, 1, 1], [], []>} : vector<16x128xf32>, vector<128x64xf32>, vector<16x64xf32> -> vector<16x64xf32>
    %c0_4 = arith.constant 0 : index
    %c0_5 = arith.constant 0 : index
    %6 = vector.load %arg4[%c0_4, %c0_5] : memref<1x64xf32, #tpu.memory_space<vmem>>, vector<1x64xf32>
    %7 = vector.broadcast %6 : vector<1x64xf32> to vector<16x64xf32>
    %8 = arith.addf %5, %7 : vector<16x64xf32>
    %cst_6 = arith.constant 5.000000e-01 : f32
    %9 = vector.broadcast %cst_6 : f32 to vector<16x64xf32>
    %10 = arith.mulf %8, %9 : vector<16x64xf32>
    %cst_7 = arith.constant 0.707106769 : f32
    %11 = vector.broadcast %cst_7 : f32 to vector<16x64xf32>
    %12 = arith.mulf %8, %11 : vector<16x64xf32>
    %13 = math.erf %12 : vector<16x64xf32>
    %cst_8 = arith.constant 1.000000e+00 : f32
    %14 = vector.broadcast %cst_8 : f32 to vector<16x64xf32>
    %15 = arith.addf %14, %13 : vector<16x64xf32>
    %16 = arith.mulf %10, %15 : vector<16x64xf32>
    %c0_9 = arith.constant 0 : index
    %c0_10 = arith.constant 0 : index
    %17 = vector.load %arg8[%c0_9, %c0_10] : memref<16x128xf32, #tpu.memory_space<vmem>>, vector<16x128xf32>
    %c0_11 = arith.constant 0 : index
    %c0_12 = arith.constant 0 : index
    %18 = vector.load %arg5[%c0_11, %c0_12] : memref<64x128xf32, #tpu.memory_space<vmem>>, vector<64x128xf32>
    %cst_13 = arith.constant dense<0.000000e+00> : vector<16x128xf32>
    %19 = tpu.matmul %16, %18, %cst_13 {dimension_numbers = #tpu.dot_dimension_numbers<[1], [0], [0], [1], [0, 0, 1, 1], [], []>} : vector<16x64xf32>, vector<64x128xf32>, vector<16x128xf32> -> vector<16x128xf32>
    %20 = arith.addf %17, %19 : vector<16x128xf32>
    %c0_14 = arith.constant 0 : index
    %c0_15 = arith.constant 0 : index
    %21 = vector.load %arg8[%c0_14, %c0_15] : memref<16x128xf32, #tpu.memory_space<vmem>>, vector<16x128xf32>
    tpu.vector_store %arg8[%c0_14, %c0_15], %20 {strides = array<i32>} : memref<16x128xf32, #tpu.memory_space<vmem>>, vector<16x128xf32>,
    %c0_i32_16 = arith.constant 0 : i32
    %22 = arith.cmpi eq, %arg1, %c0_i32_16 : i32
    %23 = arith.extui %22 : i1 to i32
    %c0_i32_17 = arith.constant 0 : i32
    %24 = arith.cmpi ne, %23, %c0_i32_17 : i32
    scf.if %24 {
      %c0_18 = arith.constant 0 : index
      %c0_19 = arith.constant 0 : index
      %25 = vector.load %arg8[%c0_18, %c0_19] : memref<16x128xf32, #tpu.memory_space<vmem>>, vector<16x128xf32>
      %c0_20 = arith.constant 0 : index
      %c0_21 = arith.constant 0 : index
      %26 = vector.load %arg6[%c0_20, %c0_21] : memref<1x128xf32, #tpu.memory_space<vmem>>, vector<1x128xf32>
      %27 = vector.broadcast %26 : vector<1x128xf32> to vector<16x128xf32>
      %28 = arith.addf %25, %27 : vector<16x128xf32>
      %c0_22 = arith.constant 0 : index
      %c0_23 = arith.constant 0 : index
      %29 = vector.load %arg7[%c0_22, %c0_23] : memref<16x128xf32, #tpu.memory_space<vmem>>, vector<16x128xf32>
      tpu.vector_store %arg7[%c0_22, %c0_23], %28 {strides = array<i32>} : memref<16x128xf32, #tpu.memory_space<vmem>>, vector<16x128xf32>,
    } else {
    }
    return
  }
  func.func @transform_0(%arg0: i32, %arg1: i32) -> (i32, i32) {
    %c0_i32 = arith.constant 0 : i32
    %c0_i32_0 = arith.constant 0 : i32
    return %arg0, %c0_i32 : i32, i32
  }
  func.func @transform_1(%arg0: i32, %arg1: i32) -> (i32, i32) {
    %c0_i32 = arith.constant 0 : i32
    %c0_i32_0 = arith.constant 0 : i32
    return %c0_i32, %arg1 : i32, i32
  }
  func.func @transform_2(%arg0: i32, %arg1: i32) -> (i32, i32) {
    %c0_i32 = arith.constant 0 : i32
    %c0_i32_0 = arith.constant 0 : i32
    return %c0_i32, %arg1 : i32, i32
  }
  func.func @transform_3(%arg0: i32, %arg1: i32) -> (i32, i32) {
    %c0_i32 = arith.constant 0 : i32
    %c0_i32_0 = arith.constant 0 : i32
    return %arg1, %c0_i32 : i32, i32
  }
  func.func @transform_4(%arg0: i32, %arg1: i32) -> (i32, i32) {
    %c0_i32 = arith.constant 0 : i32
    %c0_i32_0 = arith.constant 0 : i32
    %c0_i32_1 = arith.constant 0 : i32
    return %c0_i32, %c0_i32_0 : i32, i32
  }
  func.func @transform_5(%arg0: i32, %arg1: i32) -> (i32, i32) {
    %c0_i32 = arith.constant 0 : i32
    %c0_i32_0 = arith.constant 0 : i32
    return %arg0, %c0_i32 : i32, i32
  }
}

</mosaic_0001>

<llo_original>
// kernel: tpu_custom_call.1
$region0: #{tpu_custom_call.1}
  #allocation0 [shape = 'u32[]', space=smem, size = 0x4, offset = 0x4, fixed_abs, tag = 'smem constant byte address 0x4 - core index']
  #allocation1 [shape = 'u32[144,128]{1,0:T(1,128)}', space=vmem, size = 0x12000, scoped, tag = 'internal scratch']
  #allocation2 [shape = 'f32[16,128]{1,0:T(8,128)}', space=vmem, size = 0x2000, scoped, tag = 'scratch operand']
  %s0 = inlined_call_operand.vmem [shape: f32[16,128], index: 0, kind: input, shape index: {}]
  %s1 = inlined_call_operand.vmem [shape: f32[128,64], index: 1, kind: input, shape index: {}]
  %s2 = inlined_call_operand.vmem [shape: f32[1,64], index: 2, kind: input, shape index: {}]
  %s3 = inlined_call_operand.vmem [shape: f32[64,128], index: 3, kind: input, shape index: {}]
  %s4 = inlined_call_operand.vmem [shape: f32[1,128], index: 4, kind: input, shape index: {}]
  %s5 = inlined_call_operand.hbm [shape: f32[16,128], index: 5, kind: output, shape index: {}]
  %s6 = sld [smem:[#allocation0]]
  $region38: #{tpu_custom_call.1} parent=0
    _
  %s8 = ssub.s32 1, %s6
  %s9 = scalar_select 0, %s8, %s6
  $region1: #{tpu_custom_call.1} parent=0
    #allocation3 [shape = 'u8[8192]{0}', space=vmem, size = 0x2000, scoped, tag = 'output window, operand 0, single buffered']
    #allocation4 [shape = 's32[1]{0}', space=sflag, size = 0x4, scoped, tag = 'scoped memory for tpu_custom_call.1']
    %10 = vsyncpa [#allocation4], 0
    // Predicated region
    $region2: #{tpu_custom_call.1} parent=1 // pred_check
      _
    $region3: #{tpu_custom_call.1} parent=1 // pred_check_branch
      %12 = sbr.rel (0) target = $region5
    $region4: #{tpu_custom_call.1} parent=1 // pred_region
      _
    $region5: #{tpu_custom_call.1} parent=1 // pred_fallthru
      _
    // Predicated region
    $region6: #{tpu_custom_call.1} parent=1 // pred_check
      _
    $region7: #{tpu_custom_call.1} parent=1 // pred_check_branch
      %14 = sbr.rel (0) target = $region9
    $region8: #{tpu_custom_call.1} parent=1 // pred_region
      _
    $region9: #{tpu_custom_call.1} parent=1 // pred_fallthru
      _
    // Predicated region
    $region10: #{tpu_custom_call.1} parent=1 // pred_check
      _
    $region11: #{tpu_custom_call.1} parent=1 // pred_check_branch
      %16 = sbr.rel (0) target = $region13
    $region12: #{tpu_custom_call.1} parent=1 // pred_region
      _
    $region13: #{tpu_custom_call.1} parent=1 // pred_fallthru
      _
    // Predicated region
    $region14: #{tpu_custom_call.1} parent=1 // pred_check
      _
    $region15: #{tpu_custom_call.1} parent=1 // pred_check_branch
      %18 = sbr.rel (0) target = $region17
    $region16: #{tpu_custom_call.1} parent=1 // pred_region
      _
    $region17: #{tpu_custom_call.1} parent=1 // pred_fallthru
      _
    // Predicated region
    $region18: #{tpu_custom_call.1} parent=1 // pred_check
      _
    $region19: #{tpu_custom_call.1} parent=1 // pred_check_branch
      %20 = sbr.rel (0) target = $region21
    $region20: #{tpu_custom_call.1} parent=1 // pred_region
      _
    $region21: #{tpu_custom_call.1} parent=1 // pred_fallthru
      _
    %p21 = scmp.eq.s32.totalorder 0, 0
    // Predicated region
    $region22: #{tpu_custom_call.1} parent=1 // pred_check
      %p22 = pneg %p21
    $region23: #{tpu_custom_call.1} parent=1 // pred_check_branch
      %24 = sbr.rel (%p22) target = $region25
    $region24: #{tpu_custom_call.1} parent=1 // pred_region
      %25 = vst [vmem:[#allocation2] sm:$0xff] 0.0
      %26 = vst [vmem:[#allocation2 + $0x8] sm:$0xff] 0.0
    $region25: #{tpu_custom_call.1} parent=1 // pred_fallthru
      _
    %v27 = vld [vmem:[%s0] sm:$0xff]
    %v28 = vld [vmem:[%s0 + $0x8] sm:$0xff]
    %v29 = vld [vmem:[%s1] sm:$0xff]
    %v30 = vld [vmem:[%s1 + $0x8] sm:$0xff]
    %v31 = vld [vmem:[%s1 + $0x10] sm:$0xff]
    %v32 = vld [vmem:[%s1 + $0x18] sm:$0xff]
    %v33 = vld [vmem:[%s1 + $0x20] sm:$0xff]
    %v34 = vld [vmem:[%s1 + $0x28] sm:$0xff]
    %v35 = vld [vmem:[%s1 + $0x30] sm:$0xff]
    %v36 = vld [vmem:[%s1 + $0x38] sm:$0xff]
    %v37 = vld [vmem:[%s1 + $0x40] sm:$0xff]
    %v38 = vld [vmem:[%s1 + $0x48] sm:$0xff]
    %v39 = vld [vmem:[%s1 + $0x50] sm:$0xff]
    %v40 = vld [vmem:[%s1 + $0x58] sm:$0xff]
    %v41 = vld [vmem:[%s1 + $0x60] sm:$0xff]
    %v42 = vld [vmem:[%s1 + $0x68] sm:$0xff]
    %v43 = vld [vmem:[%s1 + $0x70] sm:$0xff]
    %v44 = vld [vmem:[%s1 + $0x78] sm:$0xff]
    %v45 = vld [vmem:[%s2] sm:$0x1]
    %v47 = vlaneseq
    %v48 = vshrl.u32 %v47, 7
    %v49 = vsub.s32 0, %v48
    %v50 = vrot.slane %v45, %v49
    %52 = vmatprep.subr.mxu0 0.0
    %53 = vmatpush1.msra.mxu0 %v29
    %54 = vmatprep.subr.mxu0 0.0
    %55 = vmatpush1.msra.mxu0 %v30
    %56 = vmatprep.subr.mxu0 0.0
    %57 = vmatpush1.msra.mxu0 %v31
    %58 = vmatprep.subr.mxu0 0.0
    %59 = vmatpush1.msra.mxu0 %v32
    %60 = vmatprep.subr.mxu0 0.0
    %61 = vmatpush1.msra.mxu0 %v33
    %62 = vmatprep.subr.mxu0 0.0
    %63 = vmatpush1.msra.mxu0 %v34
    %64 = vmatprep.subr.mxu0 0.0
    %65 = vmatpush1.msra.mxu0 %v35
    %66 = vmatprep.subr.mxu0 0.0
    %67 = vmatpush1.msra.mxu0 %v36
    %68 = vmatprep.subr.mxu0 0.0
    %69 = vmatpush1.msra.mxu0 %v37
    %70 = vmatprep.subr.mxu0 0.0
    %71 = vmatpush1.msra.mxu0 %v38
    %72 = vmatprep.subr.mxu0 0.0
    %73 = vmatpush1.msra.mxu0 %v39
    %74 = vmatprep.subr.mxu0 0.0
    %75 = vmatpush1.msra.mxu0 %v40
    %76 = vmatprep.subr.mxu0 0.0
    %77 = vmatpush1.msra.mxu0 %v41
    %78 = vmatprep.subr.mxu0 0.0
    %79 = vmatpush1.msra.mxu0 %v42
    %80 = vmatprep.subr.mxu0 0.0
    %81 = vmatpush1.msra.mxu0 %v43
    %82 = vmatprep.subr.mxu0 0.0
    %83 = vmatpush1.msra.mxu0 %v44
    %84 = vmatprep.subr.mxu0 0.0
    %85 = vmatpush1.msra.mxu0 0.0
    %86 = vmatprep.subr.mxu0 0.0
    %87 = vmatpush1.msra.mxu0 0.0
    %88 = vmatprep.subr.mxu0 0.0
    %89 = vmatpush1.msra.mxu0 0.0
    %90 = vmatprep.subr.mxu0 0.0
    %91 = vmatpush1.msra.mxu0 0.0
    %92 = vmatprep.subr.mxu0 0.0
    %93 = vmatpush1.msra.mxu0 0.0
    %94 = vmatprep.subr.mxu0 0.0
    %95 = vmatpush1.msra.mxu0 0.0
    %96 = vmatprep.subr.mxu0 0.0
    %97 = vmatpush1.msra.mxu0 0.0
    %98 = vmatprep.subr.mxu0 0.0
    %99 = vmatpush1.msra.mxu0 0.0
    %100 = vmatprep.subr.mxu0 0.0
    %101 = vmatpush1.msra.mxu0 0.0
    %102 = vmatprep.subr.mxu0 0.0
    %103 = vmatpush1.msra.mxu0 0.0
    %104 = vmatprep.subr.mxu0 0.0
    %105 = vmatpush1.msra.mxu0 0.0
    %106 = vmatprep.subr.mxu0 0.0
    %107 = vmatpush1.msra.mxu0 0.0
    %108 = vmatprep.subr.mxu0 0.0
    %109 = vmatpush1.msra.mxu0 0.0
    %110 = vmatprep.subr.mxu0 0.0
    %111 = vmatpush1.msra.mxu0 0.0
    %112 = vmatprep.subr.mxu0 0.0
    %113 = vmatpush1.msra.mxu0 0.0
    %114 = vmatprep.subr.mxu0 0.0
    %115 = vmatpush1.msra.mxu0 0.0
    %116 = vmatprep.mubr.f32.mxu0 0.0
    %117 = vmatmul.mubr.f32.gmra.mrb[0].mxu0 %v27
    %v118 = vpop.f32.mrb[0].mxu0
    %v119 = vadd.f32 %v50, %v118
    %v120 = vpop.f32.mrb[0].mxu0
    %121 = vmatprep.mubr.f32.mxu0 0.0
    %122 = vmatmul.mubr.f32.gmra.mrb[0].mxu0 %v28
    %v123 = vpop.f32.mrb[0].mxu0
    %v124 = vadd.f32 %v50, %v123
    %v125 = vpop.f32.mrb[0].mxu0
    %126 = vdwg.mxu0
    %v127 = vmul.f32 %v119, 0.5
    %v128 = vmul.f32 %v124, 0.5
    %v129 = vmul.f32 %v119, 0.70710677
    %v130 = vmul.f32 %v124, 0.70710677
    %v131 = verf.f32.pop %v129
    %v132 = verf.f32.pop %v130
    %v133 = vadd.f32 %v131, 1.0
    %v134 = vadd.f32 %v132, 1.0
    %v135 = vmul.f32 %v127, %v133
    %v136 = vmul.f32 %v128, %v134
    %v137 = vld [vmem:[#allocation2] sm:$0xff]
    %v138 = vld [vmem:[#allocation2 + $0x8] sm:$0xff]
    %v139 = vld [vmem:[%s3] sm:$0xff]
    %v140 = vld [vmem:[%s3 + $0x8] sm:$0xff]
    %v141 = vld [vmem:[%s3 + $0x10] sm:$0xff]
    %v142 = vld [vmem:[%s3 + $0x18] sm:$0xff]
    %v143 = vld [vmem:[%s3 + $0x20] sm:$0xff]
    %v144 = vld [vmem:[%s3 + $0x28] sm:$0xff]
    %v145 = vld [vmem:[%s3 + $0x30] sm:$0xff]
    %v146 = vld [vmem:[%s3 + $0x38] sm:$0xff]
    %vm147 = vcmask 523264
    %v149 = vsel %vm147, %v135, 0
    %v152 = vsel %vm147, %v136, 0
    %154 = vmatprep.subr.mxu0 0.0
    %155 = vmatpush1.msra.mxu0 %v139
    %156 = vmatprep.subr.mxu0 0.0
    %157 = vmatpush1.msra.mxu0 %v140
    %158 = vmatprep.subr.mxu0 0.0
    %159 = vmatpush1.msra.mxu0 %v141
    %160 = vmatprep.subr.mxu0 0.0
    %161 = vmatpush1.msra.mxu0 %v142
    %162 = vmatprep.subr.mxu0 0.0
    %163 = vmatpush1.msra.mxu0 %v143
    %164 = vmatprep.subr.mxu0 0.0
    %165 = vmatpush1.msra.mxu0 %v144
    %166 = vmatprep.subr.mxu0 0.0
    %167 = vmatpush1.msra.mxu0 %v145
    %168 = vmatprep.subr.mxu0 0.0
    %169 = vmatpush1.msra.mxu0 %v146
    %170 = vmatprep.subr.mxu0 0.0
    %171 = vmatpush1.msra.mxu0 0.0
    %172 = vmatprep.subr.mxu0 0.0
    %173 = vmatpush1.msra.mxu0 0.0
    %174 = vmatprep.subr.mxu0 0.0
    %175 = vmatpush1.msra.mxu0 0.0
    %176 = vmatprep.subr.mxu0 0.0
    %177 = vmatpush1.msra.mxu0 0.0
    %178 = vmatprep.subr.mxu0 0.0
    %179 = vmatpush1.msra.mxu0 0.0
    %180 = vmatprep.subr.mxu0 0.0
    %181 = vmatpush1.msra.mxu0 0.0
    %182 = vmatprep.subr.mxu0 0.0
    %183 = vmatpush1.msra.mxu0 0.0
    %184 = vmatprep.subr.mxu0 0.0
    %185 = vmatpush1.msra.mxu0 0.0
    %186 = vmatprep.subr.mxu0 0.0
    %187 = vmatpush1.msra.mxu0 0.0
    %188 = vmatprep.subr.mxu0 0.0
    %189 = vmatpush1.msra.mxu0 0.0
    %190 = vmatprep.subr.mxu0 0.0
    %191 = vmatpush1.msra.mxu0 0.0
    %192 = vmatprep.subr.mxu0 0.0
    %193 = vmatpush1.msra.mxu0 0.0
    %194 = vmatprep.subr.mxu0 0.0
    %195 = vmatpush1.msra.mxu0 0.0
    %196 = vmatprep.subr.mxu0 0.0
    %197 = vmatpush1.msra.mxu0 0.0
    %198 = vmatprep.subr.mxu0 0.0
    %199 = vmatpush1.msra.mxu0 0.0
    %200 = vmatprep.subr.mxu0 0.0
    %201 = vmatpush1.msra.mxu0 0.0
    %202 = vmatprep.subr.mxu0 0.0
    %203 = vmatpush1.msra.mxu0 0.0
    %204 = vmatprep.subr.mxu0 0.0
    %205 = vmatpush1.msra.mxu0 0.0
    %206 = vmatprep.subr.mxu0 0.0
    %207 = vmatpush1.msra.mxu0 0.0
    %208 = vmatprep.subr.mxu0 0.0
    %209 = vmatpush1.msra.mxu0 0.0
    %210 = vmatprep.subr.mxu0 0.0
    %211 = vmatpush1.msra.mxu0 0.0
    %212 = vmatprep.subr.mxu0 0.0
    %213 = vmatpush1.msra.mxu0 0.0
    %214 = vmatprep.subr.mxu0 0.0
    %215 = vmatpush1.msra.mxu0 0.0
    %216 = vmatprep.subr.mxu0 0.0
    %217 = vmatpush1.msra.mxu0 0.0
    %218 = vmatprep.mubr.f32.mxu0 0.0
    %219 = vmatmul.mubr.f32.gmra.mrb[0].mxu0 %v149
    %v220 = vpop.f32.mrb[0].mxu0
    %v221 = vadd.f32 0.0, %v220
    %v222 = vpop.f32.mrb[0].mxu0
    %223 = vmatprep.mubr.f32.mxu0 0.0
    %224 = vmatmul.mubr.f32.gmra.mrb[0].mxu0 %v152
    %v225 = vpop.f32.mrb[0].mxu0
    %v226 = vadd.f32 0.0, %v225
    %v227 = vpop.f32.mrb[0].mxu0
    %228 = vdwg.mxu0
    %v229 = vadd.f32 %v137, %v221
    %v230 = vadd.f32 %v138, %v226
    %231 = vst [vmem:[#allocation2] sm:$0xff] %v229
    %232 = vst [vmem:[#allocation2 + $0x8] sm:$0xff] %v230
    // Predicated region
    $region26: #{tpu_custom_call.1} parent=1 // pred_check
      %p233 = pneg %p21
    $region27: #{tpu_custom_call.1} parent=1 // pred_check_branch
      %235 = sbr.rel (%p233) target = $region29
    $region28: #{tpu_custom_call.1} parent=1 // pred_region
      %v236 = vld [vmem:[#allocation2] sm:$0xff]
      %v237 = vld [vmem:[#allocation2 + $0x8] sm:$0xff]
      %v238 = vld [vmem:[%s4] sm:$0x1]
      %v240 = vlaneseq
      %v241 = vshrl.u32 %v240, 7
      %v242 = vsub.s32 0, %v241
      %v243 = vrot.slane %v238, %v242
      %v245 = vadd.f32 %v236, %v243
      %v246 = vadd.f32 %v237, %v243
      %247 = vst [vmem:[#allocation3] sm:$0xff] %v245
      %248 = vst [vmem:[#allocation3 + $0x8] sm:$0xff] %v246
    $region29: #{tpu_custom_call.1} parent=1 // pred_fallthru
      _
    // Predicated region
    $region30: #{tpu_custom_call.1} parent=1 // pred_check
      _
    $region31: #{tpu_custom_call.1} parent=1 // pred_check_branch
      %250 = sbr.rel (0) target = $region33
    $region32: #{tpu_custom_call.1} parent=1 // pred_region
      %s252 = ssub.s32 256, 256
      %253 = vsyncadd [#allocation4], %s252
      %s254 = sshll.u32 [#allocation3], 4
      %s255 = int_to_ptr.vmem [resolvable:$true] %s254
      %260 = dma.vmem_to_hbm [thread:$0]  %s255, 256, %s5, [#allocation4], 128, 128, 8
    $region33: #{tpu_custom_call.1} parent=1 // pred_fallthru
      _
    // Predicated region
    $region34: #{tpu_custom_call.1} parent=1 // pred_check
      _
    $region35: #{tpu_custom_call.1} parent=1 // pred_check_branch
      %262 = sbr.rel (0) target = $region37
    $region36: #{tpu_custom_call.1} parent=1 // pred_region
      %263 = dma.done [#allocation4], 256
    $region37: #{tpu_custom_call.1} parent=1 // pred_fallthru
      _
    %264 = vsyncpa [#allocation4], 1

</llo_original>
